<compile_context>
chip_gen: v5e
topology: v5e:2x2
jax: 0.10.0
libtpu: 0.0.40
codegen_flags: <defaults>
</compile_context>

<pallas_src>
import functools
import math

import jax
import jax.numpy as jnp
from jax.experimental import pallas as pl
from jax.experimental.pallas import tpu as pltpu


def _round_up(n, m):
    return ((n + m - 1) // m) * m


def _tpu_generation():
    """Best-effort TPU generation from the device kind string (0 = unknown)."""
    try:
        kind = jax.devices()[0].device_kind.lower()
    except Exception:
        return 0
    if "7x" in kind or "v7" in kind:
        return 7
    for g in (6, 5, 4, 3, 2):
        if f"v{g}" in kind:
            return g
    return 0


_GEN = _tpu_generation()
# v6e / v7x have bf16 EUP/VPU -> bf16 tanh roughly doubles transcendental
# throughput; v5e (and unknown generations) keep f32 transcendentals.
_ACT_DTYPE = jnp.bfloat16 if _GEN >= 6 else jnp.float32


def _vmem_capacity_bytes():
    try:
        return int(pltpu.get_tpu_info().vmem_capacity_bytes)
    except Exception:
        return 64 * 1024 * 1024      # conservative fallback: v7x per-TC VMEM


def _discriminator_kernel(x_ref, w1_ref, b1_ref, w2_ref, b2_ref, w3_ref, b3_ref,
                          o_ref, *, act_dtype):
    # Fused 3-layer MLP on one (lane-packed) batch tile.
    # Weights arrive bf16 (MXU fast path), biases f32; matmuls accumulate f32.
    x = x_ref[...].astype(jnp.bfloat16)

    h1 = jnp.dot(x, w1_ref[...], preferred_element_type=jnp.float32) + b1_ref[...]
    h1 = jnp.tanh(h1.astype(act_dtype))                 # EUP (bf16 on v6e/v7x)

    h2 = jnp.dot(h1.astype(jnp.bfloat16), w2_ref[...],
                 preferred_element_type=jnp.float32) + b2_ref[...]
    h2 = jnp.tanh(h2.astype(act_dtype))

    logits = jnp.dot(h2.astype(jnp.bfloat16), w3_ref[...],
                     preferred_element_type=jnp.float32) + b3_ref[...]
    o_ref[...] = jax.nn.sigmoid(logits)                 # f32 output probabilities


def prepare_params(params):
    """One-time weight preparation (keep OUT of the per-step hot path).

    params: w1 (D,D), b1 (D,), w2 (D,H), b2 (H,), w3 (H,D), b3 (D,), with
    weights stored (in, out) -- the transpose of torch's (out, in).

    Returns P-fold block-diagonal bf16 weights and tiled f32 bias rows, where
    P = 128 // D batch rows share the 128-lane dimension (P = 1 if D >= 128 or
    128 % D != 0).
    """
    D = int(params["w1"].shape[0])
    H = int(params["w2"].shape[1])
    P = 128 // D if (D < 128 and 128 % D == 0) else 1

    def blk(w):
        w = w.astype(jnp.float32)
        if P > 1:
            w = jax.scipy.linalg.block_diag(*([w] * P))
        return w.astype(jnp.bfloat16)

    def bias_row(b, out_dim):
        b = b.astype(jnp.float32)
        if P > 1:
            b = jnp.tile(b, P)
        return b.reshape(1, P * out_dim)

    return {
        "P": P, "D": D, "H": H,
        "w1": blk(params["w1"]), "b1": bias_row(params["b1"], D),
        "w2": blk(params["w2"]), "b2": bias_row(params["b2"], H),
        "w3": blk(params["w3"]), "b3": bias_row(params["b3"], D),
    }


def discriminator_forward(x, prep, *, batch_tile_rows=2048):
    """x: (N, D) float array.  prep: output of prepare_params()."""
    N, D = x.shape
    P, H = prep["P"], prep["H"]
    assert D == prep["D"], "feature dim mismatch with prepared params"
    PD, PH = P * D, P * H

    # ---- lane packing: P rows share the 128-lane dimension ------------------
    # Only the N % P remainder is padded (tiny copy); the tile remainder is
    # handled by Pallas' partial-last-block masking, not by padding x.
    Np_rows = _round_up(N, P)
    xp = x if Np_rows == N else jnp.pad(x, ((0, Np_rows - N), (0, 0)))
    Npacked = Np_rows // P
    xp = xp.reshape(Npacked, PD)          # contiguous reshape: no data movement

    # ---- batch tile policy ---------------------------------------------------
    bt_max = max(8, _round_up(max(batch_tile_rows // P, 1), 8))
    bt = Npacked if Npacked <= bt_max else bt_max
    # Only on v7x (2 TensorCores) keep >=2 grid steps, and only when each core
    # gets a few hundred packed rows; on single-TC chips a split is pure
    # per-step overhead.
    if _GEN >= 7 and Npacked > 256:
        bt = min(bt, _round_up(pl.cdiv(Npacked, 2), 8))
    grid = (pl.cdiv(Npacked, bt),)

    # ---- VMEM budget derived from footprint + per-generation capacity -------
    weight_bytes = (PD * PD + PD * PH + PH * PD) * 2 + (2 * PD + PH) * 4
    io_bytes = bt * PD * (x.dtype.itemsize + 4)            # one in + one out tile
    footprint = weight_bytes + 2 * io_bytes + (4 << 20)    # dbl-buffered I/O + slack
    vmem_limit = int(min(max(footprint, 32 << 20), 0.75 * _vmem_capacity_bytes()))

    cost = pl.CostEstimate(
        flops=2 * Npacked * (PD * PD + PD * PH + PH * PD),
        transcendentals=Npacked * (PD + PH + 2 * PD),      # sigmoid ~ exp + recip
        bytes_accessed=Npacked * PD * (x.dtype.itemsize + 4) + weight_bytes,
    )

    resident = dict(pipeline_mode=pl.Buffered(1))   # single-buffer the constants
    # TODO(synk): for very large D (weights > ~half of VMEM) add a K-tiling grid
    # axis ("arbitrary") with an f32 VMEM accumulator instead of fully-resident
    # weights; unnecessary at the feature sizes this module is used with.
    out = pl.pallas_call(
        functools.partial(_discriminator_kernel, act_dtype=_ACT_DTYPE),
        out_shape=jax.ShapeDtypeStruct((Npacked, PD), jnp.float32),
        grid_spec=pltpu.PrefetchScalarGridSpec(
            num_scalar_prefetch=0,
            grid=grid,
            in_specs=[
                pl.BlockSpec((bt, PD), lambda i: (i, 0)),              # x tile
                pl.BlockSpec((PD, PD), lambda i: (0, 0), **resident),  # w1
                pl.BlockSpec((1, PD), lambda i: (0, 0), **resident),   # b1
                pl.BlockSpec((PD, PH), lambda i: (0, 0), **resident),  # w2
                pl.BlockSpec((1, PH), lambda i: (0, 0), **resident),   # b2
                pl.BlockSpec((PH, PD), lambda i: (0, 0), **resident),  # w3
                pl.BlockSpec((1, PD), lambda i: (0, 0), **resident),   # b3
            ],
            out_specs=pl.BlockSpec((bt, PD), lambda i: (i, 0)),
        ),
        compiler_params=pltpu.CompilerParams(
            dimension_semantics=("parallel",),
            vmem_limit_bytes=vmem_limit,
        ),
        cost_estimate=cost,
    )(xp, prep["w1"], prep["b1"], prep["w2"], prep["b2"], prep["w3"], prep["b3"])

    out = out.reshape(Np_rows, D)
    return out[:N] if Np_rows != N else out


def init_params(key, D):
    """Deterministic init mimicking nn.Linear defaults (uniform +-1/sqrt(fan_in)).
    Weights are stored (in, out) -- transpose of torch's (out, in)."""
    H = D // 2
    ks = jax.random.split(key, 6)

    def linear(kw, kb, fan_in, fan_out):
        bound = 1.0 / math.sqrt(fan_in)
        w = jax.random.uniform(kw, (fan_in, fan_out), jnp.float32, -bound, bound)
        b = jax.random.uniform(kb, (fan_out,), jnp.float32, -bound, bound)
        return w, b

    w1, b1 = linear(ks[0], ks[1], D, D)
    w2, b2 = linear(ks[2], ks[3], D, H)
    w3, b3 = linear(ks[4], ks[5], H, D)
    return {"w1": w1, "b1": b1, "w2": w2, "b2": b2, "w3": w3, "b3": b3}


def reference_forward_kernel_math(x, p, act_dtype):
    """Pure-JAX reference mirroring the kernel's exact math (bf16 matmul inputs,
    f32 accumulation, generation-gated activation dtype, f32 sigmoid)."""
    w1 = p["w1"].astype(jnp.bfloat16)
    w2 = p["w2"].astype(jnp.bfloat16)
    w3 = p["w3"].astype(jnp.bfloat16)
    h1 = jnp.dot(x.astype(jnp.bfloat16), w1,
                 preferred_element_type=jnp.float32) + p["b1"]
    h1 = jnp.tanh(h1.astype(act_dtype))
    h2 = jnp.dot(h1.astype(jnp.bfloat16), w2,
                 preferred_element_type=jnp.float32) + p["b2"]
    h2 = jnp.tanh(h2.astype(act_dtype))
    logits = jnp.dot(h2.astype(jnp.bfloat16), w3,
                     preferred_element_type=jnp.float32) + p["b3"]
    return jax.nn.sigmoid(logits)


def reference_forward_f32(x, p):
    """Full-f32 reference matching the torch module's .float() semantics."""
    xf = x.astype(jnp.float32)
    h1 = jnp.tanh(xf @ p["w1"] + p["b1"])
    h2 = jnp.tanh(h1 @ p["w2"] + p["b2"])
    return jax.nn.sigmoid(h2 @ p["w3"] + p["b3"])


if __name__ == "__main__":
    key = jax.random.PRNGKey(0)
    k_x, k_p = jax.random.split(key)

    N, D = 16, 32                       # batch=16, features=32 (hidden=16)
    x = jax.random.normal(k_x, (N, D), dtype=jnp.float32)
    params = init_params(k_p, D)
    prep = prepare_params(params)       # weight prep out of the hot path

    # Main test (N % 4 == 0 -> zero-copy lane packing, single grid step).
    out = jax.block_until_ready(discriminator_forward(x, prep))
    assert out.shape == (N, D) and out.dtype == jnp.float32
    ref_k = reference_forward_kernel_math(x, params, _ACT_DTYPE)   # same math as kernel
    ref_f = reference_forward_f32(x, params)                       # torch .float() semantics
    assert jnp.allclose(out, ref_k, atol=5e-3, rtol=5e-3), "mismatch vs kernel-math reference"
    assert jnp.allclose(out, ref_f, atol=5e-2), "mismatch vs f32 reference"

    # Ragged batch (exercises the small N % P pad + slice path).
    Nr = 13
    xr = x[:Nr]
    out_r = jax.block_until_ready(discriminator_forward(xr, prep))
    assert out_r.shape == (Nr, D)
    assert jnp.allclose(out_r, reference_forward_kernel_math(xr, params, _ACT_DTYPE),
                        atol=5e-3, rtol=5e-3), "mismatch on ragged batch"

    # Multi-step grid with a partial last block (exercises tiling + masking).
    xg = jax.random.normal(jax.random.PRNGKey(1), (72, D), dtype=jnp.float32)
    out_g = jax.block_until_ready(discriminator_forward(xg, prep, batch_tile_rows=32))
    assert out_g.shape == (72, D)
    assert jnp.allclose(out_g, reference_forward_kernel_math(xg, params, _ACT_DTYPE),
                        atol=5e-3, rtol=5e-3), "mismatch on multi-tile grid"

    print("KERNEL_OK")
</pallas_src>

<mosaic_0001>
module attributes {stable_mosaic.version = 11 : i64} {
  func.func @_discriminator_kernel(%arg0: i32, %arg1: memref<4x128xf32, #tpu.memory_space<vmem>>, %arg2: memref<128x128xbf16, #tpu.memory_space<vmem>>, %arg3: memref<1x128xf32, #tpu.memory_space<vmem>>, %arg4: memref<128x64xbf16, #tpu.memory_space<vmem>>, %arg5: memref<1x64xf32, #tpu.memory_space<vmem>>, %arg6: memref<64x128xbf16, #tpu.memory_space<vmem>>, %arg7: memref<1x128xf32, #tpu.memory_space<vmem>>, %arg8: memref<4x128xf32, #tpu.memory_space<vmem>>) attributes {dimension_semantics = [#tpu.dimension_semantics<parallel>], iteration_bounds = array<i64: 1>, scalar_prefetch = 0 : i64, scratch_operands = 0 : i64, tpu.core_type = #tpu.core_type<tc>, window_params = [{transform_indices = @transform_0, window_bounds = array<i64: 4, 128>}, {pipeline_mode = #tpu.pipeline_mode<synchronous>, transform_indices = @transform_1, window_bounds = array<i64: 128, 128>}, {pipeline_mode = #tpu.pipeline_mode<synchronous>, transform_indices = @transform_2, window_bounds = array<i64: 1, 128>}, {pipeline_mode = #tpu.pipeline_mode<synchronous>, transform_indices = @transform_3, window_bounds = array<i64: 128, 64>}, {pipeline_mode = #tpu.pipeline_mode<synchronous>, transform_indices = @transform_4, window_bounds = array<i64: 1, 64>}, {pipeline_mode = #tpu.pipeline_mode<synchronous>, transform_indices = @transform_5, window_bounds = array<i64: 64, 128>}, {pipeline_mode = #tpu.pipeline_mode<synchronous>, transform_indices = @transform_6, window_bounds = array<i64: 1, 128>}, {transform_indices = @transform_7, window_bounds = array<i64: 4, 128>}]} {
    %c0 = arith.constant 0 : index
    %c0_0 = arith.constant 0 : index
    %0 = vector.load %arg1[%c0, %c0_0] : memref<4x128xf32, #tpu.memory_space<vmem>>, vector<4x128xf32>
    %1 = arith.truncf %0 : vector<4x128xf32> to vector<4x128xbf16>
    %c0_1 = arith.constant 0 : index
    %c0_2 = arith.constant 0 : index
    %2 = vector.load %arg2[%c0_1, %c0_2] : memref<128x128xbf16, #tpu.memory_space<vmem>>, vector<128x128xbf16>
    %cst = arith.constant dense<0.000000e+00> : vector<4x128xf32>
    %3 = tpu.matmul %1, %2, %cst {dimension_numbers = #tpu.dot_dimension_numbers<[1], [0], [0], [1], [0, 0, 1, 1], [], []>} : vector<4x128xbf16>, vector<128x128xbf16>, vector<4x128xf32> -> vector<4x128xf32>
    %c0_3 = arith.constant 0 : index
    %c0_4 = arith.constant 0 : index
    %4 = vector.load %arg3[%c0_3, %c0_4] : memref<1x128xf32, #tpu.memory_space<vmem>>, vector<1x128xf32>
    %5 = vector.broadcast %4 : vector<1x128xf32> to vector<4x128xf32>
    %6 = arith.addf %3, %5 : vector<4x128xf32>
    %7 = math.tanh %6 : vector<4x128xf32>
    %8 = arith.truncf %7 : vector<4x128xf32> to vector<4x128xbf16>
    %c0_5 = arith.constant 0 : index
    %c0_6 = arith.constant 0 : index
    %9 = vector.load %arg4[%c0_5, %c0_6] : memref<128x64xbf16, #tpu.memory_space<vmem>>, vector<128x64xbf16>
    %cst_7 = arith.constant dense<0.000000e+00> : vector<4x64xf32>
    %10 = tpu.matmul %8, %9, %cst_7 {dimension_numbers = #tpu.dot_dimension_numbers<[1], [0], [0], [1], [0, 0, 1, 1], [], []>} : vector<4x128xbf16>, vector<128x64xbf16>, vector<4x64xf32> -> vector<4x64xf32>
    %c0_8 = arith.constant 0 : index
    %c0_9 = arith.constant 0 : index
    %11 = vector.load %arg5[%c0_8, %c0_9] : memref<1x64xf32, #tpu.memory_space<vmem>>, vector<1x64xf32>
    %12 = vector.broadcast %11 : vector<1x64xf32> to vector<4x64xf32>
    %13 = arith.addf %10, %12 : vector<4x64xf32>
    %14 = math.tanh %13 : vector<4x64xf32>
    %15 = arith.truncf %14 : vector<4x64xf32> to vector<4x64xbf16>
    %c0_10 = arith.constant 0 : index
    %c0_11 = arith.constant 0 : index
    %16 = vector.load %arg6[%c0_10, %c0_11] : memref<64x128xbf16, #tpu.memory_space<vmem>>, vector<64x128xbf16>
    %cst_12 = arith.constant dense<0.000000e+00> : vector<4x128xf32>
    %17 = tpu.matmul %15, %16, %cst_12 {dimension_numbers = #tpu.dot_dimension_numbers<[1], [0], [0], [1], [0, 0, 1, 1], [], []>} : vector<4x64xbf16>, vector<64x128xbf16>, vector<4x128xf32> -> vector<4x128xf32>
    %c0_13 = arith.constant 0 : index
    %c0_14 = arith.constant 0 : index
    %18 = vector.load %arg7[%c0_13, %c0_14] : memref<1x128xf32, #tpu.memory_space<vmem>>, vector<1x128xf32>
    %19 = vector.broadcast %18 : vector<1x128xf32> to vector<4x128xf32>
    %20 = arith.addf %17, %19 : vector<4x128xf32>
    %21 = arith.negf %20 : vector<4x128xf32>
    %22 = math.exp %21 : vector<4x128xf32>
    %cst_15 = arith.constant 1.000000e+00 : f32
    %23 = vector.broadcast %cst_15 : f32 to vector<4x128xf32>
    %24 = arith.addf %23, %22 : vector<4x128xf32>
    %25 = arith.divf %23, %24 : vector<4x128xf32>
    %c0_16 = arith.constant 0 : index
    %c0_17 = arith.constant 0 : index
    %26 = vector.load %arg8[%c0_16, %c0_17] : memref<4x128xf32, #tpu.memory_space<vmem>>, vector<4x128xf32>
    tpu.vector_store %arg8[%c0_16, %c0_17], %25 {strides = array<i32>} : memref<4x128xf32, #tpu.memory_space<vmem>>, vector<4x128xf32>,
    return
  }
  func.func @transform_0(%arg0: i32) -> (i32, i32) {
    %c0_i32 = arith.constant 0 : i32
    %c0_i32_0 = arith.constant 0 : i32
    return %arg0, %c0_i32 : i32, i32
  }
  func.func @transform_1(%arg0: i32) -> (i32, i32) {
    %c0_i32 = arith.constant 0 : i32
    %c0_i32_0 = arith.constant 0 : i32
    %c0_i32_1 = arith.constant 0 : i32
    return %c0_i32, %c0_i32_0 : i32, i32
  }
  func.func @transform_2(%arg0: i32) -> (i32, i32) {
    %c0_i32 = arith.constant 0 : i32
    %c0_i32_0 = arith.constant 0 : i32
    %c0_i32_1 = arith.constant 0 : i32
    return %c0_i32, %c0_i32_0 : i32, i32
  }
  func.func @transform_3(%arg0: i32) -> (i32, i32) {
    %c0_i32 = arith.constant 0 : i32
    %c0_i32_0 = arith.constant 0 : i32
    %c0_i32_1 = arith.constant 0 : i32
    return %c0_i32, %c0_i32_0 : i32, i32
  }
  func.func @transform_4(%arg0: i32) -> (i32, i32) {
    %c0_i32 = arith.constant 0 : i32
    %c0_i32_0 = arith.constant 0 : i32
    %c0_i32_1 = arith.constant 0 : i32
    return %c0_i32, %c0_i32_0 : i32, i32
  }
  func.func @transform_5(%arg0: i32) -> (i32, i32) {
    %c0_i32 = arith.constant 0 : i32
    %c0_i32_0 = arith.constant 0 : i32
    %c0_i32_1 = arith.constant 0 : i32
    return %c0_i32, %c0_i32_0 : i32, i32
  }
  func.func @transform_6(%arg0: i32) -> (i32, i32) {
    %c0_i32 = arith.constant 0 : i32
    %c0_i32_0 = arith.constant 0 : i32
    %c0_i32_1 = arith.constant 0 : i32
    return %c0_i32, %c0_i32_0 : i32, i32
  }
  func.func @transform_7(%arg0: i32) -> (i32, i32) {
    %c0_i32 = arith.constant 0 : i32
    %c0_i32_0 = arith.constant 0 : i32
    return %arg0, %c0_i32 : i32, i32
  }
}

</mosaic_0001>

<llo_original>
// kernel: tpu_custom_call.1
$region0: #{tpu_custom_call.1}
  #allocation0 [shape = 'u32[]', space=smem, size = 0x4, offset = 0x4, fixed_abs, tag = 'smem constant byte address 0x4 - core index']
  #allocation1 [shape = 'u32[72,128]{1,0:T(1,128)}', space=vmem, size = 0x9000, scoped, tag = 'internal scratch']
  %s0 = inlined_call_operand.hbm [shape: f32[4,128], index: 0, kind: input, shape index: {}]
  %s1 = inlined_call_operand.vmem [shape: bf16[128,128], index: 1, kind: input, shape index: {}]
  %s2 = inlined_call_operand.vmem [shape: f32[1,128], index: 2, kind: input, shape index: {}]
  %s3 = inlined_call_operand.vmem [shape: bf16[128,64], index: 3, kind: input, shape index: {}]
  %s4 = inlined_call_operand.vmem [shape: f32[1,64], index: 4, kind: input, shape index: {}]
  %s5 = inlined_call_operand.vmem [shape: bf16[64,128], index: 5, kind: input, shape index: {}]
  %s6 = inlined_call_operand.vmem [shape: f32[1,128], index: 6, kind: input, shape index: {}]
  %s7 = inlined_call_operand.hbm [shape: f32[4,128], index: 7, kind: output, shape index: {}]
  %s8 = sld [smem:[#allocation0]]
  $region42: #{tpu_custom_call.1} parent=0
    _
  %s10 = ssub.s32 1, %s8
  %s11 = scalar_select 0, %s10, %s8
  $region1: #{tpu_custom_call.1} parent=0
    #allocation2 [shape = 'u8[2048]{0}', space=vmem, size = 0x800, scoped, tag = 'input window, operand 0, single buffered']
    #allocation3 [shape = 's32[1]{0}', space=sflag, size = 0x4, scoped, tag = 'scoped memory for tpu_custom_call.1']
    #allocation4 [shape = 's32[1]{0}', space=sflag, size = 0x4, scoped, tag = 'scoped memory for tpu_custom_call.1']
    #allocation5 [shape = 'u8[2048]{0}', space=vmem, size = 0x800, scoped, tag = 'output window, operand 0, single buffered']
    %12 = vsyncpa [#allocation3], 0
    %13 = vsyncpa [#allocation4], 0
    // Predicated region
    $region2: #{tpu_custom_call.1} parent=1 // pred_check
      _
    $region3: #{tpu_custom_call.1} parent=1 // pred_check_branch
      %15 = sbr.rel (0) target = $region5
    $region4: #{tpu_custom_call.1} parent=1 // pred_region
      %17 = vsyncadd [#allocation3], 0
      %s19 = sshll.u32 %s0, 4
      %s20 = int_to_ptr.hbm [resolvable:$true] %s19
      %s21 = sshll.u32 [#allocation2], 4
      %s22 = int_to_ptr.vmem [resolvable:$true] %s21
      %24 = dma.hbm_to_vmem [thread:$0]  %s20, 64, %s22, [#allocation3]
    $region5: #{tpu_custom_call.1} parent=1 // pred_fallthru
      _
    // Predicated region
    $region6: #{tpu_custom_call.1} parent=1 // pred_check
      _
    $region7: #{tpu_custom_call.1} parent=1 // pred_check_branch
      %26 = sbr.rel (0) target = $region9
    $region8: #{tpu_custom_call.1} parent=1 // pred_region
      _
    $region9: #{tpu_custom_call.1} parent=1 // pred_fallthru
      _
    // Predicated region
    $region10: #{tpu_custom_call.1} parent=1 // pred_check
      _
    $region11: #{tpu_custom_call.1} parent=1 // pred_check_branch
      %28 = sbr.rel (0) target = $region13
    $region12: #{tpu_custom_call.1} parent=1 // pred_region
      _
    $region13: #{tpu_custom_call.1} parent=1 // pred_fallthru
      _
    // Predicated region
    $region14: #{tpu_custom_call.1} parent=1 // pred_check
      _
    $region15: #{tpu_custom_call.1} parent=1 // pred_check_branch
      %30 = sbr.rel (0) target = $region17
    $region16: #{tpu_custom_call.1} parent=1 // pred_region
      _
    $region17: #{tpu_custom_call.1} parent=1 // pred_fallthru
      _
    // Predicated region
    $region18: #{tpu_custom_call.1} parent=1 // pred_check
      _
    $region19: #{tpu_custom_call.1} parent=1 // pred_check_branch
      %32 = sbr.rel (0) target = $region21
    $region20: #{tpu_custom_call.1} parent=1 // pred_region
      _
    $region21: #{tpu_custom_call.1} parent=1 // pred_fallthru
      _
    // Predicated region
    $region22: #{tpu_custom_call.1} parent=1 // pred_check
      _
    $region23: #{tpu_custom_call.1} parent=1 // pred_check_branch
      %34 = sbr.rel (0) target = $region25
    $region24: #{tpu_custom_call.1} parent=1 // pred_region
      _
    $region25: #{tpu_custom_call.1} parent=1 // pred_fallthru
      _
    // Predicated region
    $region26: #{tpu_custom_call.1} parent=1 // pred_check
      _
    $region27: #{tpu_custom_call.1} parent=1 // pred_check_branch
      %36 = sbr.rel (0) target = $region29
    $region28: #{tpu_custom_call.1} parent=1 // pred_region
      _
    $region29: #{tpu_custom_call.1} parent=1 // pred_fallthru
      _
    // Predicated region
    $region30: #{tpu_custom_call.1} parent=1 // pred_check
      _
    $region31: #{tpu_custom_call.1} parent=1 // pred_check_branch
      %38 = sbr.rel (0) target = $region33
    $region32: #{tpu_custom_call.1} parent=1 // pred_region
      %40 = dma.done [#allocation3], 64
    $region33: #{tpu_custom_call.1} parent=1 // pred_fallthru
      _
    %v42 = vld [vmem:[#allocation2] sm:$0xf]
    %v43 = vpack.c.bf16 %v42, %v42
    %v44 = vld [vmem:[%s1] sm:$0xf]
    %v45 = vld [vmem:[%s1 + $0x4] sm:$0xf]
    %v46 = vld [vmem:[%s1 + $0x8] sm:$0xf]
    %v47 = vld [vmem:[%s1 + $0xc] sm:$0xf]
    %v48 = vld [vmem:[%s1 + $0x10] sm:$0xf]
    %v49 = vld [vmem:[%s1 + $0x14] sm:$0xf]
    %v50 = vld [vmem:[%s1 + $0x18] sm:$0xf]
    %v51 = vld [vmem:[%s1 + $0x1c] sm:$0xf]
    %v52 = vld [vmem:[%s1 + $0x20] sm:$0xf]
    %v53 = vld [vmem:[%s1 + $0x24] sm:$0xf]
    %v54 = vld [vmem:[%s1 + $0x28] sm:$0xf]
    %v55 = vld [vmem:[%s1 + $0x2c] sm:$0xf]
    %v56 = vld [vmem:[%s1 + $0x30] sm:$0xf]
    %v57 = vld [vmem:[%s1 + $0x34] sm:$0xf]
    %v58 = vld [vmem:[%s1 + $0x38] sm:$0xf]
    %v59 = vld [vmem:[%s1 + $0x3c] sm:$0xf]
    %v60 = vld [vmem:[%s2] sm:$0x1]
    %v62 = vperm.slane %v60, 0
    %v80 = vunpack.c.l.b16 %v44
    %v81 = vunpack.c.l.b16 %v45
    %v82 = vunpack.c.l.b16 %v46
    %v83 = vunpack.c.l.b16 %v47
    %v84 = vunpack.c.l.b16 %v48
    %v85 = vunpack.c.l.b16 %v49
    %v86 = vunpack.c.l.b16 %v50
    %v87 = vunpack.c.l.b16 %v51
    %v88 = vunpack.c.l.b16 %v52
    %v89 = vunpack.c.l.b16 %v53
    %v90 = vunpack.c.l.b16 %v54
    %v91 = vunpack.c.l.b16 %v55
    %v92 = vunpack.c.l.b16 %v56
    %v93 = vunpack.c.l.b16 %v57
    %v94 = vunpack.c.l.b16 %v58
    %v95 = vunpack.c.l.b16 %v59
    %v96 = vpack.c.b16 %v81, %v80
    %v97 = vpack.c.b16 %v83, %v82
    %v98 = vpack.c.b16 %v85, %v84
    %v99 = vpack.c.b16 %v87, %v86
    %v100 = vpack.c.b16 %v89, %v88
    %v101 = vpack.c.b16 %v91, %v90
    %v102 = vpack.c.b16 %v93, %v92
    %v103 = vpack.c.b16 %v95, %v94
    %112 = vmatpush.bf16.msra.mxu0 %v103
    %113 = vmatpush.bf16.msra.mxu0 %v102
    %114 = vmatpush.bf16.msra.mxu0 %v101
    %115 = vmatpush.bf16.msra.mxu0 %v100
    %116 = vmatpush.bf16.msra.mxu0 %v99
    %117 = vmatpush.bf16.msra.mxu0 %v98
    %118 = vmatpush.bf16.msra.mxu0 %v97
    %119 = vmatpush.bf16.msra.mxu0 %v96
    %120 = vmatmul.bf16.gmra.mxu0 %v43
    %v121 = vpop.f32.mrf.mxu0
    %v122 = vadd.f32 %v62, %v121
    %v123 = vpop.f32.mrf.mxu0
    %124 = vdwg.mxu0
    %v125 = vtanh.pop %v122
    %v126 = vpack.c.bf16 %v125, %v125
    %v127 = vld [vmem:[%s3] sm:$0xf]
    %v128 = vld [vmem:[%s3 + $0x4] sm:$0xf]
    %v129 = vld [vmem:[%s3 + $0x8] sm:$0xf]
    %v130 = vld [vmem:[%s3 + $0xc] sm:$0xf]
    %v131 = vld [vmem:[%s3 + $0x10] sm:$0xf]
    %v132 = vld [vmem:[%s3 + $0x14] sm:$0xf]
    %v133 = vld [vmem:[%s3 + $0x18] sm:$0xf]
    %v134 = vld [vmem:[%s3 + $0x1c] sm:$0xf]
    %v135 = vld [vmem:[%s3 + $0x20] sm:$0xf]
    %v136 = vld [vmem:[%s3 + $0x24] sm:$0xf]
    %v137 = vld [vmem:[%s3 + $0x28] sm:$0xf]
    %v138 = vld [vmem:[%s3 + $0x2c] sm:$0xf]
    %v139 = vld [vmem:[%s3 + $0x30] sm:$0xf]
    %v140 = vld [vmem:[%s3 + $0x34] sm:$0xf]
    %v141 = vld [vmem:[%s3 + $0x38] sm:$0xf]
    %v142 = vld [vmem:[%s3 + $0x3c] sm:$0xf]
    %v143 = vld [vmem:[%s4] sm:$0x1]
    %v145 = vperm.slane %v143, 0
    %v163 = vunpack.c.l.b16 %v127
    %v164 = vunpack.c.l.b16 %v128
    %v165 = vunpack.c.l.b16 %v129
    %v166 = vunpack.c.l.b16 %v130
    %v167 = vunpack.c.l.b16 %v131
    %v168 = vunpack.c.l.b16 %v132
    %v169 = vunpack.c.l.b16 %v133
    %v170 = vunpack.c.l.b16 %v134
    %v171 = vunpack.c.l.b16 %v135
    %v172 = vunpack.c.l.b16 %v136
    %v173 = vunpack.c.l.b16 %v137
    %v174 = vunpack.c.l.b16 %v138
    %v175 = vunpack.c.l.b16 %v139
    %v176 = vunpack.c.l.b16 %v140
    %v177 = vunpack.c.l.b16 %v141
    %v178 = vunpack.c.l.b16 %v142
    %v179 = vpack.c.b16 %v164, %v163
    %v180 = vpack.c.b16 %v166, %v165
    %v181 = vpack.c.b16 %v168, %v167
    %v182 = vpack.c.b16 %v170, %v169
    %v183 = vpack.c.b16 %v172, %v171
    %v184 = vpack.c.b16 %v174, %v173
    %v185 = vpack.c.b16 %v176, %v175
    %v186 = vpack.c.b16 %v178, %v177
    %195 = vmatpush.bf16.msra.mxu0 %v186
    %196 = vmatpush.bf16.msra.mxu0 %v185
    %197 = vmatpush.bf16.msra.mxu0 %v184
    %198 = vmatpush.bf16.msra.mxu0 %v183
    %199 = vmatpush.bf16.msra.mxu0 %v182
    %200 = vmatpush.bf16.msra.mxu0 %v181
    %201 = vmatpush.bf16.msra.mxu0 %v180
    %202 = vmatpush.bf16.msra.mxu0 %v179
    %203 = vmatmul.bf16.gmra.mxu0 %v126
    %v204 = vpop.f32.mrf.mxu0
    %v205 = vadd.f32 %v145, %v204
    %v206 = vpop.f32.mrf.mxu0
    %207 = vdwg.mxu0
    %v208 = vtanh.pop %v205
    %v209 = vpack.c.bf16 %v208, %v208
    %v210 = vld [vmem:[%s5] sm:$0xf]
    %v211 = vld [vmem:[%s5 + $0x4] sm:$0xf]
    %v212 = vld [vmem:[%s5 + $0x8] sm:$0xf]
    %v213 = vld [vmem:[%s5 + $0xc] sm:$0xf]
    %v214 = vld [vmem:[%s5 + $0x10] sm:$0xf]
    %v215 = vld [vmem:[%s5 + $0x14] sm:$0xf]
    %v216 = vld [vmem:[%s5 + $0x18] sm:$0xf]
    %v217 = vld [vmem:[%s5 + $0x1c] sm:$0xf]
    %v218 = vld [vmem:[%s6] sm:$0x1]
    %v220 = vperm.slane %v218, 0
    %v230 = vunpack.c.l.b16 %v210
    %v231 = vunpack.c.l.b16 %v211
    %v232 = vunpack.c.l.b16 %v212
    %v233 = vunpack.c.l.b16 %v213
    %v234 = vunpack.c.l.b16 %v214
    %v235 = vunpack.c.l.b16 %v215
    %v236 = vunpack.c.l.b16 %v216
    %v237 = vunpack.c.l.b16 %v217
    %v238 = vpack.c.b16 %v231, %v230
    %v239 = vpack.c.b16 %v233, %v232
    %v240 = vpack.c.b16 %v235, %v234
    %v241 = vpack.c.b16 %v237, %v236
    %vm246 = vcmask 523264
    %v248 = vsel %vm246, %v209, 0
    %250 = vmatpush.bf16.msra.mxu0 0
    %251 = vmatpush.bf16.msra.mxu0 0
    %252 = vmatpush.bf16.msra.mxu0 0
    %253 = vmatpush.bf16.msra.mxu0 0
    %254 = vmatpush.bf16.msra.mxu0 %v241
    %255 = vmatpush.bf16.msra.mxu0 %v240
    %256 = vmatpush.bf16.msra.mxu0 %v239
    %257 = vmatpush.bf16.msra.mxu0 %v238
    %258 = vmatmul.bf16.gmra.mxu0 %v248
    %v259 = vpop.f32.mrf.mxu0
    %v260 = vadd.f32 %v220, %v259
    %v261 = vpop.f32.mrf.mxu0
    %262 = vdwg.mxu0
    %v263 = vxor.u32 %v260, 2147483648
    %v264 = vmul.f32 %v263, 1.442695
    %v265 = vpow.pop %v264
    %v266 = vadd.f32 %v265, 1.0
    %v267 = vrcp.pop %v266
    %v268 = vmul.f32 %v266, %v267
    %v269 = vsub.f32 1.0, %v268
    %v270 = vmul.f32 %v267, %v269
    %v271 = vadd.f32 %v267, %v270
    %vm272 = vweird.f32 %v266
    %vm273 = vweird.f32 %v267
    %vm274 = vmor %vm272, %vm273
    %v275 = vsel %vm274, %v267, %v271
    %v276 = vand.u32 2147483647, %v266
    %vm277 = vcmp.eq.f32.partialorder %v276, 8.507059e+37
    %v278 = vand.u32 %v266, 2147483648
    %v279 = vor.u32 1.1754944e-38, %v278
    %v280 = vsel %vm277, %v279, %v275
    %v281 = vmul.f32 1.0, %v280
    %282 = vst [vmem:[#allocation5] sm:$0xf] %v281
    // Predicated region
    $region34: #{tpu_custom_call.1} parent=1 // pred_check
      _
    $region35: #{tpu_custom_call.1} parent=1 // pred_check_branch
      %284 = sbr.rel (0) target = $region37
    $region36: #{tpu_custom_call.1} parent=1 // pred_region
      %286 = vsyncadd [#allocation4], 0
      %s288 = sshll.u32 [#allocation5], 4
      %s289 = int_to_ptr.vmem [resolvable:$true] %s288
      %s290 = sshll.u32 %s7, 4
      %s291 = int_to_ptr.hbm [resolvable:$true] %s290
      %293 = dma.vmem_to_hbm [thread:$0]  %s289, 64, %s291, [#allocation4]
    $region37: #{tpu_custom_call.1} parent=1 // pred_fallthru
      _
    // Predicated region
    $region38: #{tpu_custom_call.1} parent=1 // pred_check
      _
    $region39: #{tpu_custom_call.1} parent=1 // pred_check_branch
      %295 = sbr.rel (0) target = $region41
    $region40: #{tpu_custom_call.1} parent=1 // pred_region
      %297 = dma.done [#allocation4], 64
    $region41: #{tpu_custom_call.1} parent=1 // pred_fallthru
      _
    %298 = vsyncpa [#allocation3], 1
    %299 = vsyncpa [#allocation4], 1

</llo_original>
